<compile_context>
chip_gen: v5e
topology: v5e:2x2
jax: 0.10.0
libtpu: 0.0.40
codegen_flags: <defaults>
</compile_context>

<pallas_src>
import functools
import math

import jax
import jax.numpy as jnp
import numpy as np
from jax import lax
from jax.experimental import pallas as pl
from jax.experimental.pallas import tpu as pltpu


def _ohem_ce_kernel(labels_ref, logits_ref, loss_ref, *, ignore_lb):
    """Per-pixel cross-entropy with ignore_index masking.

    Block layout (pixels on lanes, classes on sublanes):
      labels_ref: (1, 1, tile_p) int32
      logits_ref: (1, C, tile_p) native dtype (bf16/f32)
      loss_ref:   (1, 1, tile_p) float32
    """
    logits = logits_ref[0].astype(jnp.float32)      # (C, tile_p)
    labels = labels_ref[0]                          # (1, tile_p) int32

    # numerically-stable cross entropy: logsumexp(logits) - logits[label]
    m = jnp.max(logits, axis=0, keepdims=True)                             # (1, tile_p)
    lse = m + jnp.log(jnp.sum(jnp.exp(logits - m), axis=0, keepdims=True))  # (1, tile_p)

    class_ids = lax.broadcasted_iota(jnp.int32, logits.shape, 0)           # (C, tile_p)
    # select+reduce instead of one-hot multiply (no f32 one-hot temp)
    picked = jnp.sum(jnp.where(class_ids == labels, logits, 0.0),
                     axis=0, keepdims=True)                                # (1, tile_p)

    valid = labels != ignore_lb
    loss_ref[0] = jnp.where(valid, lse - picked, 0.0)


def ohem_ce_loss(logits_nchw, labels_nhw, thresh=0.7, ignore_lb=255, tile_p=4096):
    N, C, H, W = logits_nchw.shape
    HW = H * W
    P = N * HW

    # Free reshapes only (no transpose, no dtype cast, no pad): keep pixels on
    # the minor (lane) axis and pass the model's native dtype straight through.
    logits3d = logits_nchw.reshape(N, C, HW)
    labels3d = labels_nhw.reshape(N, 1, HW).astype(jnp.int32)

    # Tile selection: cap each logits block at ~2 MiB so double buffering never
    # pressures VMEM (v7x: 64 MiB total / 32 MiB default scoped limit).
    itemsize = jnp.dtype(logits_nchw.dtype).itemsize
    max_tile = max(128, (2 * 1024 * 1024 // max(1, C * itemsize)) // 128 * 128)
    tile = min(tile_p, max_tile)
    if HW <= tile:
        tile = HW                      # full-extent block is always a legal shape
    n_ptiles = pl.cdiv(HW, tile)       # ragged tail handled by Pallas edge-block masking

    kernel = functools.partial(_ohem_ce_kernel, ignore_lb=ignore_lb)

    loss3d = pl.pallas_call(
        kernel,
        out_shape=jax.ShapeDtypeStruct((N, 1, HW), jnp.float32),
        grid=(N, n_ptiles),
        in_specs=[pl.BlockSpec((1, 1, tile), lambda n, p: (n, 0, p)),
                  pl.BlockSpec((1, C, tile), lambda n, p: (n, 0, p))],
        out_specs=pl.BlockSpec((1, 1, tile), lambda n, p: (n, 0, p)),
        compiler_params=pltpu.CompilerParams(
            dimension_semantics=("parallel", "parallel")),
    )(labels3d, logits3d)

    loss_flat = loss3d.reshape(P)
    labels_flat = labels3d.reshape(P)
    thresh_val = jnp.float32(-math.log(thresh))

    # OHEM statistics (cheap fused XLA reductions over arrays that live in HBM
    # anyway).  Ignored pixels carry loss == 0 < thresh, so `hard` excludes them.
    n_valid = jnp.sum((labels_flat != ignore_lb).astype(jnp.int32))
    n_min = n_valid // 16
    hard = loss_flat > thresh_val
    cnt_hard = jnp.sum(hard.astype(jnp.int32))
    sum_hard = jnp.sum(jnp.where(hard, loss_flat, 0.0))

    def _topk_mean():
        # Only executes when cnt_hard < n_min (lax.cond runs a single branch at
        # runtime).  Full sort kept for exact top-k semantics; a threshold
        # selection would be cheaper if this fallback fires frequently.
        sorted_desc = -jnp.sort(-loss_flat)
        k_mask = jnp.arange(P) < n_min
        return jnp.sum(jnp.where(k_mask, sorted_desc, 0.0)) / n_min.astype(jnp.float32)

    def _hard_mean():
        # cnt_hard == 0 here only if no pixel is valid; 0/0 -> NaN matches the
        # PyTorch mean-of-empty behaviour.
        return sum_hard / cnt_hard.astype(jnp.float32)

    return lax.cond(cnt_hard < n_min, _topk_mean, _hard_mean)


if __name__ == "__main__":
    key = jax.random.PRNGKey(0)
    k1, k2, k3 = jax.random.split(key, 3)
    N, C, H, W = 2, 4, 16, 16
    logits = jax.random.normal(k1, (N, C, H, W), dtype=jnp.float32)
    labels = jax.random.randint(k2, (N, H, W), 0, C, dtype=jnp.int32)
    ignore_mask = jax.random.bernoulli(k3, 0.1, (N, H, W))
    labels = jnp.where(ignore_mask, 255, labels)

    out = jax.jit(ohem_ce_loss)(logits, labels)
    out = jax.block_until_ready(out)

    # reference check in numpy (mirrors the PyTorch forward exactly)
    lg = np.asarray(jnp.transpose(logits, (0, 2, 3, 1)).reshape(-1, C))
    lb = np.asarray(labels).reshape(-1)
    valid = lb != 255
    m = lg.max(axis=-1, keepdims=True)
    lse = m[:, 0] + np.log(np.exp(lg - m).sum(-1))
    picked = lg[np.arange(lg.shape[0]), np.clip(lb, 0, C - 1)]
    loss_ref = np.where(valid, lse - picked, 0.0)
    th = -math.log(0.7)
    n_min = int(valid.sum()) // 16
    hard = loss_ref[loss_ref > th]
    if hard.size < n_min:
        hard = np.sort(loss_ref)[::-1][:n_min]
    ref = hard.mean()
    assert abs(float(out) - float(ref)) < 1e-4, (float(out), float(ref))

    print("KERNEL_OK")
</pallas_src>

<mosaic_0001>
module attributes {stable_mosaic.version = 11 : i64} {
  func.func @_ohem_ce_kernel(%arg0: i32, %arg1: i32, %arg2: memref<1x1x256xi32, #tpu.memory_space<vmem>>, %arg3: memref<1x4x256xf32, #tpu.memory_space<vmem>>, %arg4: memref<1x1x256xf32, #tpu.memory_space<vmem>>) attributes {dimension_semantics = [#tpu.dimension_semantics<parallel>, #tpu.dimension_semantics<parallel>], iteration_bounds = array<i64: 2, 1>, scalar_prefetch = 0 : i64, scratch_operands = 0 : i64, tpu.core_type = #tpu.core_type<tc>, window_params = [{transform_indices = @transform_0, window_bounds = array<i64: 1, 1, 256>}, {transform_indices = @transform_1, window_bounds = array<i64: 1, 4, 256>}, {transform_indices = @transform_2, window_bounds = array<i64: 1, 1, 256>}]} {
    %c0 = arith.constant 0 : index
    %c0_0 = arith.constant 0 : index
    %c0_1 = arith.constant 0 : index
    %0 = vector.load %arg3[%c0, %c0_0, %c0_1] : memref<1x4x256xf32, #tpu.memory_space<vmem>>, vector<1x4x256xf32>
    %1 = vector.shape_cast %0 : vector<1x4x256xf32> to vector<4x256xf32>
    %c0_2 = arith.constant 0 : index
    %c0_3 = arith.constant 0 : index
    %c0_4 = arith.constant 0 : index
    %2 = vector.load %arg2[%c0_2, %c0_3, %c0_4] : memref<1x1x256xi32, #tpu.memory_space<vmem>>, vector<1x1x256xi32>
    %3 = vector.shape_cast %2 : vector<1x1x256xi32> to vector<1x256xi32>
    %cst = arith.constant dense<0xFF800000> : vector<256xf32>
    %4 = vector.multi_reduction <maximumf>, %1, %cst [0] : vector<4x256xf32> to vector<256xf32>
    %5 = vector.shape_cast %4 : vector<256xf32> to vector<1x256xf32>
    %6 = vector.broadcast %5 : vector<1x256xf32> to vector<4x256xf32>
    %7 = arith.subf %1, %6 : vector<4x256xf32>
    %8 = math.exp %7 : vector<4x256xf32>
    %cst_5 = arith.constant dense<0.000000e+00> : vector<256xf32>
    %9 = vector.multi_reduction <add>, %8, %cst_5 [0] : vector<4x256xf32> to vector<256xf32>
    %10 = vector.shape_cast %9 : vector<256xf32> to vector<1x256xf32>
    %11 = math.log %10 : vector<1x256xf32>
    %12 = arith.addf %5, %11 : vector<1x256xf32>
    %13 = tpu.iota {dimensions = array<i32: 0>} : vector<4x256xi32>
    %14 = vector.broadcast %3 : vector<1x256xi32> to vector<4x256xi32>
    %15 = arith.cmpi eq, %13, %14 : vector<4x256xi32>
    %cst_6 = arith.constant 0.000000e+00 : f32
    %16 = vector.broadcast %cst_6 : f32 to vector<4x256xf32>
    %17 = arith.select %15, %1, %16 : vector<4x256xi1>, vector<4x256xf32>
    %cst_7 = arith.constant dense<0.000000e+00> : vector<256xf32>
    %18 = vector.multi_reduction <add>, %17, %cst_7 [0] : vector<4x256xf32> to vector<256xf32>
    %19 = vector.shape_cast %18 : vector<256xf32> to vector<1x256xf32>
    %c255_i32 = arith.constant 255 : i32
    %20 = vector.broadcast %c255_i32 : i32 to vector<1x256xi32>
    %21 = arith.cmpi ne, %3, %20 : vector<1x256xi32>
    %22 = arith.subf %12, %19 : vector<1x256xf32>
    %cst_8 = arith.constant 0.000000e+00 : f32
    %23 = vector.broadcast %cst_8 : f32 to vector<1x256xf32>
    %24 = arith.select %21, %22, %23 : vector<1x256xi1>, vector<1x256xf32>
    %c0_9 = arith.constant 0 : index
    %c0_10 = arith.constant 0 : index
    %c0_11 = arith.constant 0 : index
    %25 = vector.load %arg4[%c0_9, %c0_10, %c0_11] : memref<1x1x256xf32, #tpu.memory_space<vmem>>, vector<1x1x256xf32>
    %26 = vector.shape_cast %25 : vector<1x1x256xf32> to vector<1x256xf32>
    %27 = vector.shape_cast %24 : vector<1x256xf32> to vector<1x1x256xf32>
    tpu.vector_store %arg4[%c0_9, %c0_10, %c0_11], %27 {strides = array<i32>} : memref<1x1x256xf32, #tpu.memory_space<vmem>>, vector<1x1x256xf32>,
    return
  }
  func.func @transform_0(%arg0: i32, %arg1: i32) -> (i32, i32, i32) {
    %c0_i32 = arith.constant 0 : i32
    %c0_i32_0 = arith.constant 0 : i32
    return %arg0, %c0_i32, %arg1 : i32, i32, i32
  }
  func.func @transform_1(%arg0: i32, %arg1: i32) -> (i32, i32, i32) {
    %c0_i32 = arith.constant 0 : i32
    %c0_i32_0 = arith.constant 0 : i32
    return %arg0, %c0_i32, %arg1 : i32, i32, i32
  }
  func.func @transform_2(%arg0: i32, %arg1: i32) -> (i32, i32, i32) {
    %c0_i32 = arith.constant 0 : i32
    %c0_i32_0 = arith.constant 0 : i32
    return %arg0, %c0_i32, %arg1 : i32, i32, i32
  }
}

</mosaic_0001>

<llo_original>
// kernel: neg.0
$region0: #{neg.0}
  #allocation0 [shape = 's32[1]{0}', space=sflag, size = 0x4, scoped, tag = 'scoped memory for neg.0']
  %s0 = inlined_call_operand.vmem [shape: f32[2,1,256], index: 0, kind: input, shape index: {}]
  %s1 = inlined_call_operand.vmem [shape: f32[2,1,256], index: 1, kind: output, shape index: {}]
  %v2 = vld [vmem:[%s0] sm:$0x1]
  %3 = xla_tuple %v2
  %4 = xla_tuple %3
  %v5 = vxor.u32 %v2, 2147483648
  %6 = xla_tuple %v5
  %7 = vst [vmem:[%s1] sm:$0x1] %v5
  %s8 = scalar_lea.vmem %s0, 2
  %v9 = vld [vmem:[%s8] sm:$0x1]
  %10 = xla_tuple %v9
  %11 = xla_tuple %10
  %v12 = vxor.u32 %v9, 2147483648
  %13 = xla_tuple %v12
  %s14 = scalar_lea.vmem %s1, 2
  %15 = vst [vmem:[%s14] sm:$0x1] %v12
  %s16 = scalar_lea.vmem %s0, 1
  %v17 = vld [vmem:[%s16] sm:$0x1]
  %18 = xla_tuple %v17
  %19 = xla_tuple %18
  %v20 = vxor.u32 %v17, 2147483648
  %21 = xla_tuple %v20
  %s22 = scalar_lea.vmem %s1, 1
  %23 = vst [vmem:[%s22] sm:$0x1] %v20
  %s24 = scalar_lea.vmem %s0, 3
  %v25 = vld [vmem:[%s24] sm:$0x1]
  %26 = xla_tuple %v25
  %27 = xla_tuple %26
  %v28 = vxor.u32 %v25, 2147483648
  %29 = xla_tuple %v28
  %s30 = scalar_lea.vmem %s1, 3
  %31 = vst [vmem:[%s30] sm:$0x1] %v28

// kernel: ohem_ce_loss.1
$region0: #{ohem_ce_loss.1}
  #allocation0 [shape = 'u32[]', space=smem, size = 0x4, offset = 0x4, fixed_abs, tag = 'smem constant byte address 0x4 - core index']
  #allocation1 [shape = 'u32[72,128]{1,0:T(1,128)}', space=vmem, size = 0x9000, scoped, tag = 'internal scratch']
  %s0 = inlined_call_operand.vmem [shape: s32[2,1,256], index: 0, kind: input, shape index: {}]
  %s1 = inlined_call_operand.vmem [shape: f32[2,4,256], index: 1, kind: input, shape index: {}]
  %s2 = inlined_call_operand.vmem [shape: f32[2,1,256], index: 2, kind: output, shape index: {}]
  %s3 = sld [smem:[#allocation0]]
  $region41: #{ohem_ce_loss.1} parent=0
    _
  %s5 = ssub.s32 1, %s3
  %s6 = scalar_select 0, %s5, %s3
  loop: start=0, step=1, limit=4
  $region2: #{ohem_ce_loss.1} parent=0 // loop_pre_header
    _
  $region3: #{ohem_ce_loss.1} parent=0 // loop_header
    %s8 = sphi 0, %s12
    %p9 = scmp.ge.s32.totalorder %s8, 4
    %s15 = sphi 0, %s27
    %s16 = sphi 0, %s23
    %s17 = sphi 0, %s15
    %s18 = sphi 0, %s16
    %s19 = sphi 0, %s17
    %s20 = sphi 0, %s18
    %s32 = sphi 0, %s34
    %s35 = sphi 0, %s32
    %s36 = sphi 0, %s35
    %s52 = sphi 0, %s36
    %s60 = sphi 0, %s62
    %s63 = sphi 0, %s60
    %s64 = sphi 0, %s63
    %s80 = sphi 0, %s64
    %s88 = sphi 0, %s90
    %s91 = sphi 0, %s88
    %s92 = sphi 0, %s91
    %s108 = sphi 0, %s92
  $region4: #{ohem_ce_loss.1} parent=0 // loop_header_branch
    %11 = sbr.rel (%p9) target = $region8
  $region5: #{ohem_ce_loss.1} parent=0 // loop_body
    %s13 = ssub.s32 %s8, 1
    %s14 = ssub.s32 %s8, 2
    %s21 = sadd.s32 1, %s16
    %p22 = scmp.ge.s32.totalorder %s21, 1
    %s23 = scalar_select %p22, 0, %s21
    %s24 = sadd.s32 1, %s15
    %s25 = scalar_select %p22, %s24, %s15
    %p26 = scmp.ge.s32.totalorder %s25, 2
    %s27 = scalar_select %p26, 0, %s25
    %s28 = ssub.s32 %s15, %s27
    %s29 = ssub.s32 %s16, %s23
    %s30 = sor.u32 %s28, %s29
    %p31 = scmp.eq.s32.totalorder %s30, 0
    %s33 = sadd.s32 %s32, 1
    %s34 = scalar_select %p31, %s32, %s33
    %p37 = pneg %p31
    %p38 = scmp.eq.s32.totalorder %s8, 1
    %p39 = por %p37, %p38
    %p40 = scmp.ne.s32.totalorder %s32, %s35
    %p41 = scmp.eq.s32.totalorder %s8, 0
    %p42 = por %p40, %p41
    %p43 = scmp.ne.s32.totalorder %s32, %s35
    %p44 = scmp.eq.s32.totalorder %s13, 1
    %p45 = por %p43, %p44
    %p46 = scmp.ne.s32.totalorder %s35, %s36
    %p47 = scmp.eq.s32.totalorder %s13, 0
    %p48 = por %p46, %p47
    %p49 = scmp.ne.s32.totalorder %s35, %s36
    %p50 = scmp.eq.s32.totalorder %s14, 1
    %p51 = por %p49, %p50
    %p53 = scmp.ne.s32.totalorder %s36, %s52
    %p54 = scmp.eq.s32.totalorder %s14, 0
    %p55 = por %p53, %p54
    %s56 = ssub.s32 %s15, %s27
    %s57 = ssub.s32 %s16, %s23
    %s58 = sor.u32 %s56, %s57
    %p59 = scmp.eq.s32.totalorder %s58, 0
    %s61 = sadd.s32 %s60, 1
    %s62 = scalar_select %p59, %s60, %s61
    %p65 = pneg %p59
    %p66 = scmp.eq.s32.totalorder %s8, 1
    %p67 = por %p65, %p66
    %p68 = scmp.ne.s32.totalorder %s60, %s63
    %p69 = scmp.eq.s32.totalorder %s8, 0
    %p70 = por %p68, %p69
    %p71 = scmp.ne.s32.totalorder %s60, %s63
    %p72 = scmp.eq.s32.totalorder %s13, 1
    %p73 = por %p71, %p72
    %p74 = scmp.ne.s32.totalorder %s63, %s64
    %p75 = scmp.eq.s32.totalorder %s13, 0
    %p76 = por %p74, %p75
    %p77 = scmp.ne.s32.totalorder %s63, %s64
    %p78 = scmp.eq.s32.totalorder %s14, 1
    %p79 = por %p77, %p78
    %p81 = scmp.ne.s32.totalorder %s64, %s80
    %p82 = scmp.eq.s32.totalorder %s14, 0
    %p83 = por %p81, %p82
    %s84 = ssub.s32 %s15, %s27
    %s85 = ssub.s32 %s16, %s23
    %s86 = sor.u32 %s84, %s85
    %p87 = scmp.eq.s32.totalorder %s86, 0
    %s89 = sadd.s32 %s88, 1
    %s90 = scalar_select %p87, %s88, %s89
    %p93 = pneg %p87
    %p94 = scmp.eq.s32.totalorder %s8, 1
    %p95 = por %p93, %p94
    %p96 = scmp.ne.s32.totalorder %s88, %s91
    %p97 = scmp.eq.s32.totalorder %s8, 0
    %p98 = por %p96, %p97
    %p99 = scmp.ne.s32.totalorder %s88, %s91
    %p100 = scmp.eq.s32.totalorder %s13, 1
    %p101 = por %p99, %p100
    %p102 = scmp.ne.s32.totalorder %s91, %s92
    %p103 = scmp.eq.s32.totalorder %s13, 0
    %p104 = por %p102, %p103
    %p105 = scmp.ne.s32.totalorder %s91, %s92
    %p106 = scmp.eq.s32.totalorder %s14, 1
    %p107 = por %p105, %p106
    %p109 = scmp.ne.s32.totalorder %s92, %s108
    %p110 = scmp.eq.s32.totalorder %s14, 0
    %p111 = por %p109, %p110
    %p112 = scmp.le.s32.totalorder 1, %s8
    %p113 = scmp.lt.s32.totalorder %s8, 3
    %p114 = pnand %p112, %p113
    %p115 = pneg %p114
    // Predicated region
    $region9: #{ohem_ce_loss.1} parent=5 // pred_check
      _
    $region10: #{ohem_ce_loss.1} parent=5 // pred_check_branch
      %117 = sbr.rel (%p114) target = $region12
    $region11: #{ohem_ce_loss.1} parent=5 // pred_region
      %s118 = ssub.s32 %s8, 1
    $region12: #{ohem_ce_loss.1} parent=5 // pred_fallthru
      _
    %p119 = scmp.lt.s32.totalorder %s8, 2
    // Predicated region
    $region13: #{ohem_ce_loss.1} parent=5 // pred_check
      %p120 = pneg %p119
    $region14: #{ohem_ce_loss.1} parent=5 // pred_check_branch
      %122 = sbr.rel (%p120) target = $region16
    $region15: #{ohem_ce_loss.1} parent=5 // pred_region
      // Predicated region
      $region17: #{ohem_ce_loss.1} parent=15 // pred_check
        %p123 = pneg %p42
      $region18: #{ohem_ce_loss.1} parent=15 // pred_check_branch
        %125 = sbr.rel (%p123) target = $region20
      $region19: #{ohem_ce_loss.1} parent=15 // pred_region
        %s126 = smul.u32 2, %s16
        %p127 = scmp.lt.s32.totalorder %s15, 1
        %s128 = scalar_select %p127, %s15, 1
        %p129 = scmp.lt.s32.totalorder %s126, 1
        %s130 = scalar_select %p129, %s126, 1
        %s131 = smul.addr %s128, 2
        %s132 = sadd.s32 %s130, %s131
        %s133 = scalar_lea.vmem %s0, %s132
        %s134 = smul.u32 2, %s16
      $region20: #{ohem_ce_loss.1} parent=15 // pred_fallthru
        _
      // Predicated region
      $region21: #{ohem_ce_loss.1} parent=15 // pred_check
        %p135 = pneg %p70
      $region22: #{ohem_ce_loss.1} parent=15 // pred_check_branch
        %137 = sbr.rel (%p135) target = $region24
      $region23: #{ohem_ce_loss.1} parent=15 // pred_region
        %s138 = smul.u32 2, %s16
        %p139 = scmp.lt.s32.totalorder %s15, 1
        %s140 = scalar_select %p139, %s15, 1
        %p141 = scmp.lt.s32.totalorder %s138, 1
        %s142 = scalar_select %p141, %s138, 1
        %s143 = smul.addr %s140, 2
        %s144 = sadd.s32 %s142, %s143
        %s145 = smul.addr %s144, 4
        %s146 = scalar_lea.vmem %s1, %s145
        %s147 = smul.u32 2, %s16
      $region24: #{ohem_ce_loss.1} parent=15 // pred_fallthru
        _
    $region16: #{ohem_ce_loss.1} parent=5 // pred_fallthru
      _
    %p148 = scmp.le.s32.totalorder 1, %s8
    %p149 = scmp.lt.s32.totalorder %s8, 3
    %p150 = pnand %p148, %p149
    %p151 = pneg %p150
    // Predicated region
    $region25: #{ohem_ce_loss.1} parent=5 // pred_check
      _
    $region26: #{ohem_ce_loss.1} parent=5 // pred_check_branch
      %153 = sbr.rel (%p150) target = $region28
    $region27: #{ohem_ce_loss.1} parent=5 // pred_region
      %s154 = ssub.s32 %s8, 1
      %s155 = smul.u32 2, %s18
      %p156 = scmp.lt.s32.totalorder %s17, 1
      %s157 = scalar_select %p156, %s17, 1
      %p158 = scmp.lt.s32.totalorder %s155, 1
      %s159 = scalar_select %p158, %s155, 1
      %s160 = smul.addr %s157, 2
      %s161 = sadd.s32 %s159, %s160
      %s162 = scalar_lea.vmem %s0, %s161
      %p163 = pneg %p48
      %p164 = pneg %p45
      %s165 = smul.u32 2, %s18
      %p166 = scmp.lt.s32.totalorder %s17, 1
      %s167 = scalar_select %p166, %s17, 1
      %p168 = scmp.lt.s32.totalorder %s165, 1
      %s169 = scalar_select %p168, %s165, 1
      %s170 = smul.addr %s167, 2
      %s171 = sadd.s32 %s169, %s170
      %s172 = smul.addr %s171, 4
      %s173 = scalar_lea.vmem %s1, %s172
      %p174 = pneg %p76
      %p175 = pneg %p73
      %p176 = pneg %p104
      %p177 = pneg %p101
      %s178 = smul.u32 2, %s18
      %p179 = scmp.lt.s32.totalorder %s17, 1
      %s180 = scalar_select %p179, %s17, 1
      %p181 = scmp.lt.s32.totalorder %s178, 1
      %s182 = scalar_select %p181, %s178, 1
      %s183 = smul.addr %s180, 2
      %s184 = sadd.s32 %s182, %s183
      %s185 = scalar_lea.vmem %s2, %s184
      %s186 = smul.u32 2, %s18
      %p187 = scmp.lt.s32.totalorder %s17, 1
      %s188 = scalar_select %p187, %s17, 1
      %p189 = scmp.lt.s32.totalorder %s186, 1
      %s190 = scalar_select %p189, %s186, 1
      %s191 = smul.addr %s188, 2
      %s192 = sadd.s32 %s190, %s191
      %s193 = scalar_lea.vmem %s0, %s192
      %s194 = smul.u32 2, %s18
      %s195 = smul.u32 2, %s18
      %p196 = scmp.lt.s32.totalorder %s17, 1
      %s197 = scalar_select %p196, %s17, 1
      %p198 = scmp.lt.s32.totalorder %s195, 1
      %s199 = scalar_select %p198, %s195, 1
      %s200 = smul.addr %s197, 2
      %s201 = sadd.s32 %s199, %s200
      %s202 = smul.addr %s201, 4
      %s203 = scalar_lea.vmem %s1, %s202
      %s204 = smul.u32 2, %s18
      %s205 = smul.u32 2, %s18
      %p206 = scmp.lt.s32.totalorder %s17, 1
      %s207 = scalar_select %p206, %s17, 1
      %p208 = scmp.lt.s32.totalorder %s205, 1
      %s209 = scalar_select %p208, %s205, 1
      %s210 = smul.addr %s207, 2
      %s211 = sadd.s32 %s209, %s210
      %s212 = scalar_lea.vmem %s2, %s211
      %s213 = smul.u32 2, %s18
      %v214 = vld [vmem:[%s203] sm:$0xff]
      %v215 = vld [vmem:[%s193] sm:$0x3]
      %217 = vst [vmem:[#allocation1] ss:$2 sm:$0xff] %v214
      %v218 = vld.sshfl [vmem:[#allocation1] sm:$0xff pattern:$0x75316420]
      %v219 = vld.sshfl [vmem:[#allocation1 + $0x8] sm:$0xff pattern:$0x75316420]
      %vm222 = vcmask 1043456
      %v223 = vsel %vm222, %v218, -inf
      %v224 = vrot.slane %v223, 4
      %v225 = vmax.f32 %v223, %v224
      %v226 = vrot.slane %v225, 2
      %v227 = vmax.f32 %v225, %v226
      %v228 = vrot.slane %v227, 1
      %v229 = vmax.f32 %v227, %v228
      %v230 = vsel %vm222, %v219, -inf
      %v231 = vrot.slane %v230, 4
      %v232 = vmax.f32 %v230, %v231
      %v233 = vrot.slane %v232, 2
      %v234 = vmax.f32 %v232, %v233
      %v235 = vrot.slane %v234, 1
      %v236 = vmax.f32 %v234, %v235
      %v239 = vrot.slane %v236, 4
      %v240 = vsel %vm222, %v229, %v239
      %v242 = vsub.f32 %v214, %v240
      %v243 = vmul.f32 %v242, 1.442695
      %v244 = vpow.pop %v243
      %246 = vst [vmem:[#allocation1] ss:$2 sm:$0xff] %v244
      %v247 = vld.sshfl [vmem:[#allocation1] sm:$0xff pattern:$0x75316420]
      %v248 = vld.sshfl [vmem:[#allocation1 + $0x8] sm:$0xff pattern:$0x75316420]
      %v251 = vsel %vm222, %v247, 0.0
      %v252 = vrot.slane %v251, 4
      %v253 = vadd.f32 %v251, %v252
      %v254 = vrot.slane %v253, 2
      %v255 = vadd.f32 %v253, %v254
      %v256 = vrot.slane %v255, 1
      %v257 = vadd.f32 %v255, %v256
      %v258 = vsel %vm222, %v248, 0.0
      %v259 = vrot.slane %v258, 4
      %v260 = vadd.f32 %v258, %v259
      %v261 = vrot.slane %v260, 2
      %v262 = vadd.f32 %v260, %v261
      %v263 = vrot.slane %v262, 1
      %v264 = vadd.f32 %v262, %v263
      %v265 = vlog2.pop %v257
      %v266 = vmul.f32 %v265, 0.6931472
      %v267 = vlog2.pop %v264
      %v268 = vmul.f32 %v267, 0.6931472
      %v269 = vadd.f32 %v229, %v266
      %v270 = vadd.f32 %v236, %v268
      %v271 = vlaneseq
      %v272 = vshrl.u32 %v271, 7
      %v273 = vperm.slane %v215, 0
      %v274 = vperm.slane %v215, 1
      %vm275 = vcmp.eq.s32.totalorder %v272, %v273
      %vm276 = vcmp.eq.s32.totalorder %v272, %v274
      %277 = vst [vmem:[#allocation1] ss:$2 sm:$0xff] %v214
      %v278 = vld.sshfl [vmem:[#allocation1] sm:$0xff pattern:$0x75316420]
      %v279 = vld.sshfl [vmem:[#allocation1 + $0x8] sm:$0xff pattern:$0x75316420]
      %v282 = vsel %vm275, %v278, 0.0
      %v283 = vsel %vm276, %v279, 0.0
      %v284 = vsel %vm222, %v282, 0.0
      %v285 = vrot.slane %v284, 4
      %v286 = vadd.f32 %v284, %v285
      %v287 = vrot.slane %v286, 2
      %v288 = vadd.f32 %v286, %v287
      %v289 = vrot.slane %v288, 1
      %v290 = vadd.f32 %v288, %v289
      %v291 = vsel %vm222, %v283, 0.0
      %v292 = vrot.slane %v291, 4
      %v293 = vadd.f32 %v291, %v292
      %v294 = vrot.slane %v293, 2
      %v295 = vadd.f32 %v293, %v294
      %v296 = vrot.slane %v295, 1
      %v297 = vadd.f32 %v295, %v296
      %vm298 = vcmp.ne.s32.totalorder %v215, 255
      %v299 = vsub.f32 %v269, %v290
      %v300 = vsub.f32 %v270, %v297
      %v303 = vrot.slane %v300, 7
      %vm304 = vcmask 1040384
      %v305 = vsel %vm304, %v299, %v303
      %v307 = vsel %vm298, %v305, 0.0
      %v308 = vlaneseq
      %vm309 = vcmp.ge.s32.totalorder %v308, 0
      %vm310 = vcmp.lt.s32.totalorder %v308, 256
      %vm311 = vmand %vm309, %vm310
      %312 = vst.msk [vmem:[%s212] sm:$0x3] %vm311, %v307
      %s313 = smul.u32 2, %s18
      %p314 = scmp.lt.s32.totalorder %s17, 1
      %s315 = scalar_select %p314, %s17, 1
      %p316 = scmp.lt.s32.totalorder %s313, 1
      %s317 = scalar_select %p316, %s313, 1
      %s318 = smul.addr %s315, 2
      %s319 = sadd.s32 %s317, %s318
      %s320 = scalar_lea.vmem %s2, %s319
      // Predicated region
      $region29: #{ohem_ce_loss.1} parent=27 // pred_check
        %p321 = pneg %p101
      $region30: #{ohem_ce_loss.1} parent=27 // pred_check_branch
        %323 = sbr.rel (%p321) target = $region32
      $region31: #{ohem_ce_loss.1} parent=27 // pred_region
        %s324 = smul.u32 2, %s18
      $region32: #{ohem_ce_loss.1} parent=27 // pred_fallthru
        _
    $region28: #{ohem_ce_loss.1} parent=5 // pred_fallthru
      _
    %p325 = scmp.le.s32.totalorder 2, %s8
    // Predicated region
    $region33: #{ohem_ce_loss.1} parent=5 // pred_check
      %p326 = pneg %p325
    $region34: #{ohem_ce_loss.1} parent=5 // pred_check_branch
      %328 = sbr.rel (%p326) target = $region36
    $region35: #{ohem_ce_loss.1} parent=5 // pred_region
      %s329 = ssub.s32 %s8, 2
      // Predicated region
      $region37: #{ohem_ce_loss.1} parent=35 // pred_check
        %p330 = pneg %p107
      $region38: #{ohem_ce_loss.1} parent=35 // pred_check_branch
        %332 = sbr.rel (%p330) target = $region40
      $region39: #{ohem_ce_loss.1} parent=35 // pred_region
        %s333 = smul.u32 2, %s20
        %p334 = scmp.lt.s32.totalorder %s19, 1
        %s335 = scalar_select %p334, %s19, 1
        %p336 = scmp.lt.s32.totalorder %s333, 1
        %s337 = scalar_select %p336, %s333, 1
        %s338 = smul.addr %s335, 2
        %s339 = sadd.s32 %s337, %s338
        %s340 = scalar_lea.vmem %s2, %s339
      $region40: #{ohem_ce_loss.1} parent=35 // pred_fallthru
        _
    $region36: #{ohem_ce_loss.1} parent=5 // pred_fallthru
      _
  $region6: #{ohem_ce_loss.1} parent=0 // loop_footer
    %s12 = sadd.s32 1, %s8
  $region7: #{ohem_ce_loss.1} parent=0 // loop_footer_branch
    %7 = sbr.rel target = $region3
  $region8: #{ohem_ce_loss.1} parent=0 // loop_exit
    _

</llo_original>
